<compile_context>
chip_gen: v7x
topology: tpu7x:2x2x1
jax: 0.10.0
libtpu: 0.0.40
codegen_flags: <defaults>
</compile_context>

<pallas_src>
import jax
import jax.numpy as jnp
from jax.experimental import pallas as pl
from jax.experimental.pallas import tpu as pltpu

IN_FEATURES = 8
OUT_FEATURES = 4


def qnn_kernel(x_ref,
               w1_ref, b1_ref,
               w2_ref, b2_ref,
               w3_ref, b3_ref,
               w4_ref, b4_ref,
               o_ref):
    # Layer 1: (tb, 8) @ (8, H) + (1, H), ReLU
    h = jnp.dot(x_ref[...], w1_ref[...], preferred_element_type=jnp.float32)
    h = jnp.maximum(h + b1_ref[...], 0.0)
    # Layer 2: (tb, H) @ (H, H) + (1, H), ReLU
    h = jnp.dot(h, w2_ref[...], preferred_element_type=jnp.float32)
    h = jnp.maximum(h + b2_ref[...], 0.0)
    # Layer 3: (tb, H) @ (H, H) + (1, H), ReLU
    h = jnp.dot(h, w3_ref[...], preferred_element_type=jnp.float32)
    h = jnp.maximum(h + b3_ref[...], 0.0)
    # Head: (tb, H) @ (H, 4) + (1, 4), no activation.  Unpadded (tb, 4) store.
    out = jnp.dot(h, w4_ref[...], preferred_element_type=jnp.float32)
    o_ref[...] = (out + b4_ref[...]).astype(o_ref.dtype)


def _round_up(n, m):
    return ((n + m - 1) // m) * m


def qnn_forward(x, params, *, tb=1024):
    """Pallas forward pass of QNN.  x: (B, 8) float32.  Returns (B, 4) float32."""
    (w1, b1), (w2, b2), (w3, b3), (w4, b4) = params
    B = x.shape[0]
    H = w1.shape[1]

    # Batch tile: large enough to amortize the ~0.35 us per-grid-step overhead,
    # but capped so there are at least 2 grid steps when B allows it (so the
    # "parallel" axis shards across both TensorCores on v7x).  Multiple of 8
    # keeps the f32 sublane tiling valid.
    tb_eff = max(8, min(tb, _round_up(pl.cdiv(B, 2), 8)))
    n_tiles = pl.cdiv(B, tb_eff)  # ragged last block handled by Pallas masking

    def resident(shape):
        # Weights/biases: same block index at every grid step -> fetched once,
        # kept VMEM-resident across the batch loop.
        return pl.BlockSpec(shape, lambda i: (0, 0))

    in_specs = [
        pl.BlockSpec((tb_eff, IN_FEATURES), lambda i: (i, 0)),
        resident(w1.shape), resident(b1.shape),
        resident(w2.shape), resident(b2.shape),
        resident(w3.shape), resident(b3.shape),
        resident(w4.shape), resident(b4.shape),
    ]
    out_spec = pl.BlockSpec((tb_eff, OUT_FEATURES), lambda i: (i, 0))

    # Accurate cost hint (mem-bound kernel): real byte / FLOP counts.
    param_bytes = sum(int(w.size + b.size) for (w, b) in params) * 4
    flops = 2 * B * (IN_FEATURES * H + H * H + H * H + H * OUT_FEATURES)
    bytes_accessed = B * (IN_FEATURES + OUT_FEATURES) * 4 + param_bytes
    cost = pl.CostEstimate(flops=flops, transcendentals=0,
                           bytes_accessed=bytes_accessed)

    out = pl.pallas_call(
        qnn_kernel,
        out_shape=jax.ShapeDtypeStruct((B, OUT_FEATURES), jnp.float32),
        grid=(n_tiles,),
        in_specs=in_specs,
        out_specs=out_spec,
        compiler_params=pltpu.CompilerParams(
            dimension_semantics=("parallel",)),
        cost_estimate=cost,
    )(x, w1, b1, w2, b2, w3, b3, w4, b4)

    return out


def init_params(key, hidden_layer_size):
    """Deterministic synthetic parameters matching nn.Linear shapes.

    PyTorch nn.Linear(in, out) uses U(-1/sqrt(in), 1/sqrt(in)) for weight and
    bias; reproduced here with weights stored transposed: (in, out)."""
    dims = [(IN_FEATURES, hidden_layer_size),
            (hidden_layer_size, hidden_layer_size),
            (hidden_layer_size, hidden_layer_size),
            (hidden_layer_size, OUT_FEATURES)]
    params = []
    for (fan_in, fan_out) in dims:
        key, kw, kb = jax.random.split(key, 3)
        bound = 1.0 / jnp.sqrt(jnp.float32(fan_in))
        w = jax.random.uniform(kw, (fan_in, fan_out), jnp.float32,
                               minval=-bound, maxval=bound)
        b = jax.random.uniform(kb, (1, fan_out), jnp.float32,
                               minval=-bound, maxval=bound)
        params.append((w, b))
    return params


def qnn_reference(x, params):
    h = x
    for i, (w, b) in enumerate(params):
        h = h @ w + b
        if i < len(params) - 1:
            h = jnp.maximum(h, 0.0)
    return h


if __name__ == "__main__":
    key = jax.random.PRNGKey(0)
    hidden_layer_size = 32
    batch = 2

    key, kp, kx = jax.random.split(key, 3)
    params = init_params(kp, hidden_layer_size)
    x = jax.random.normal(kx, (batch, IN_FEATURES), jnp.float32)

    out = qnn_forward(x, params)
    out = jax.block_until_ready(out)

    ref = qnn_reference(x, params)
    assert out.shape == (batch, OUT_FEATURES), out.shape
    assert jnp.allclose(out, ref, atol=1e-5, rtol=1e-5), (out, ref)

    # Batch larger than one tile and not tile-aligned (ragged last block).
    key, kx2 = jax.random.split(key)
    x_big = jax.random.normal(kx2, (700, IN_FEATURES), jnp.float32)
    out_big = jax.block_until_ready(qnn_forward(x_big, params))
    ref_big = qnn_reference(x_big, params)
    assert out_big.shape == (700, OUT_FEATURES), out_big.shape
    assert jnp.allclose(out_big, ref_big, atol=1e-5, rtol=1e-5)

    print("KERNEL_OK")
</pallas_src>

<mosaic_0001>
module attributes {stable_mosaic.version = 11 : i64} {
  func.func @qnn_kernel(%arg0: i32, %arg1: memref<8x8xf32, #tpu.memory_space<vmem>>, %arg2: memref<8x32xf32, #tpu.memory_space<vmem>>, %arg3: memref<1x32xf32, #tpu.memory_space<vmem>>, %arg4: memref<32x32xf32, #tpu.memory_space<vmem>>, %arg5: memref<1x32xf32, #tpu.memory_space<vmem>>, %arg6: memref<32x32xf32, #tpu.memory_space<vmem>>, %arg7: memref<1x32xf32, #tpu.memory_space<vmem>>, %arg8: memref<32x4xf32, #tpu.memory_space<vmem>>, %arg9: memref<1x4xf32, #tpu.memory_space<vmem>>, %arg10: memref<8x4xf32, #tpu.memory_space<vmem>>) attributes {dimension_semantics = [#tpu.dimension_semantics<parallel>], iteration_bounds = array<i64: 1>, scalar_prefetch = 0 : i64, scratch_operands = 0 : i64, tpu.core_type = #tpu.core_type<tc>, window_params = [{transform_indices = @transform_0, window_bounds = array<i64: 8, 8>}, {pipeline_mode = #tpu.pipeline_mode<synchronous>, transform_indices = @transform_1, window_bounds = array<i64: 8, 32>}, {pipeline_mode = #tpu.pipeline_mode<synchronous>, transform_indices = @transform_2, window_bounds = array<i64: 1, 32>}, {pipeline_mode = #tpu.pipeline_mode<synchronous>, transform_indices = @transform_3, window_bounds = array<i64: 32, 32>}, {pipeline_mode = #tpu.pipeline_mode<synchronous>, transform_indices = @transform_4, window_bounds = array<i64: 1, 32>}, {pipeline_mode = #tpu.pipeline_mode<synchronous>, transform_indices = @transform_5, window_bounds = array<i64: 32, 32>}, {pipeline_mode = #tpu.pipeline_mode<synchronous>, transform_indices = @transform_6, window_bounds = array<i64: 1, 32>}, {pipeline_mode = #tpu.pipeline_mode<synchronous>, transform_indices = @transform_7, window_bounds = array<i64: 32, 4>}, {pipeline_mode = #tpu.pipeline_mode<synchronous>, transform_indices = @transform_8, window_bounds = array<i64: 1, 4>}, {transform_indices = @transform_9, window_bounds = array<i64: 8, 4>}]} {
    %c0 = arith.constant 0 : index
    %c0_0 = arith.constant 0 : index
    %0 = vector.load %arg1[%c0, %c0_0] : memref<8x8xf32, #tpu.memory_space<vmem>>, vector<8x8xf32>
    %c0_1 = arith.constant 0 : index
    %c0_2 = arith.constant 0 : index
    %1 = vector.load %arg2[%c0_1, %c0_2] : memref<8x32xf32, #tpu.memory_space<vmem>>, vector<8x32xf32>
    %cst = arith.constant dense<0.000000e+00> : vector<8x32xf32>
    %2 = tpu.matmul %0, %1, %cst {dimension_numbers = #tpu.dot_dimension_numbers<[1], [0], [0], [1], [0, 0, 1, 1], [], []>} : vector<8x8xf32>, vector<8x32xf32>, vector<8x32xf32> -> vector<8x32xf32>
    %c0_3 = arith.constant 0 : index
    %c0_4 = arith.constant 0 : index
    %3 = vector.load %arg3[%c0_3, %c0_4] : memref<1x32xf32, #tpu.memory_space<vmem>>, vector<1x32xf32>
    %4 = vector.broadcast %3 : vector<1x32xf32> to vector<8x32xf32>
    %5 = arith.addf %2, %4 : vector<8x32xf32>
    %cst_5 = arith.constant 0.000000e+00 : f32
    %6 = vector.broadcast %cst_5 : f32 to vector<8x32xf32>
    %7 = arith.maximumf %5, %6 : vector<8x32xf32>
    %c0_6 = arith.constant 0 : index
    %c0_7 = arith.constant 0 : index
    %8 = vector.load %arg4[%c0_6, %c0_7] : memref<32x32xf32, #tpu.memory_space<vmem>>, vector<32x32xf32>
    %cst_8 = arith.constant dense<0.000000e+00> : vector<8x32xf32>
    %9 = tpu.matmul %7, %8, %cst_8 {dimension_numbers = #tpu.dot_dimension_numbers<[1], [0], [0], [1], [0, 0, 1, 1], [], []>} : vector<8x32xf32>, vector<32x32xf32>, vector<8x32xf32> -> vector<8x32xf32>
    %c0_9 = arith.constant 0 : index
    %c0_10 = arith.constant 0 : index
    %10 = vector.load %arg5[%c0_9, %c0_10] : memref<1x32xf32, #tpu.memory_space<vmem>>, vector<1x32xf32>
    %11 = vector.broadcast %10 : vector<1x32xf32> to vector<8x32xf32>
    %12 = arith.addf %9, %11 : vector<8x32xf32>
    %cst_11 = arith.constant 0.000000e+00 : f32
    %13 = vector.broadcast %cst_11 : f32 to vector<8x32xf32>
    %14 = arith.maximumf %12, %13 : vector<8x32xf32>
    %c0_12 = arith.constant 0 : index
    %c0_13 = arith.constant 0 : index
    %15 = vector.load %arg6[%c0_12, %c0_13] : memref<32x32xf32, #tpu.memory_space<vmem>>, vector<32x32xf32>
    %cst_14 = arith.constant dense<0.000000e+00> : vector<8x32xf32>
    %16 = tpu.matmul %14, %15, %cst_14 {dimension_numbers = #tpu.dot_dimension_numbers<[1], [0], [0], [1], [0, 0, 1, 1], [], []>} : vector<8x32xf32>, vector<32x32xf32>, vector<8x32xf32> -> vector<8x32xf32>
    %c0_15 = arith.constant 0 : index
    %c0_16 = arith.constant 0 : index
    %17 = vector.load %arg7[%c0_15, %c0_16] : memref<1x32xf32, #tpu.memory_space<vmem>>, vector<1x32xf32>
    %18 = vector.broadcast %17 : vector<1x32xf32> to vector<8x32xf32>
    %19 = arith.addf %16, %18 : vector<8x32xf32>
    %cst_17 = arith.constant 0.000000e+00 : f32
    %20 = vector.broadcast %cst_17 : f32 to vector<8x32xf32>
    %21 = arith.maximumf %19, %20 : vector<8x32xf32>
    %c0_18 = arith.constant 0 : index
    %c0_19 = arith.constant 0 : index
    %22 = vector.load %arg8[%c0_18, %c0_19] : memref<32x4xf32, #tpu.memory_space<vmem>>, vector<32x4xf32>
    %cst_20 = arith.constant dense<0.000000e+00> : vector<8x4xf32>
    %23 = tpu.matmul %21, %22, %cst_20 {dimension_numbers = #tpu.dot_dimension_numbers<[1], [0], [0], [1], [0, 0, 1, 1], [], []>} : vector<8x32xf32>, vector<32x4xf32>, vector<8x4xf32> -> vector<8x4xf32>
    %c0_21 = arith.constant 0 : index
    %c0_22 = arith.constant 0 : index
    %24 = vector.load %arg9[%c0_21, %c0_22] : memref<1x4xf32, #tpu.memory_space<vmem>>, vector<1x4xf32>
    %25 = vector.broadcast %24 : vector<1x4xf32> to vector<8x4xf32>
    %26 = arith.addf %23, %25 : vector<8x4xf32>
    %c0_23 = arith.constant 0 : index
    %c0_24 = arith.constant 0 : index
    %27 = vector.load %arg10[%c0_23, %c0_24] : memref<8x4xf32, #tpu.memory_space<vmem>>, vector<8x4xf32>
    tpu.vector_store %arg10[%c0_23, %c0_24], %26 {strides = array<i32>} : memref<8x4xf32, #tpu.memory_space<vmem>>, vector<8x4xf32>,
    return
  }
  func.func @transform_0(%arg0: i32) -> (i32, i32) {
    %c0_i32 = arith.constant 0 : i32
    %c0_i32_0 = arith.constant 0 : i32
    return %arg0, %c0_i32 : i32, i32
  }
  func.func @transform_1(%arg0: i32) -> (i32, i32) {
    %c0_i32 = arith.constant 0 : i32
    %c0_i32_0 = arith.constant 0 : i32
    %c0_i32_1 = arith.constant 0 : i32
    return %c0_i32, %c0_i32_0 : i32, i32
  }
  func.func @transform_2(%arg0: i32) -> (i32, i32) {
    %c0_i32 = arith.constant 0 : i32
    %c0_i32_0 = arith.constant 0 : i32
    %c0_i32_1 = arith.constant 0 : i32
    return %c0_i32, %c0_i32_0 : i32, i32
  }
  func.func @transform_3(%arg0: i32) -> (i32, i32) {
    %c0_i32 = arith.constant 0 : i32
    %c0_i32_0 = arith.constant 0 : i32
    %c0_i32_1 = arith.constant 0 : i32
    return %c0_i32, %c0_i32_0 : i32, i32
  }
  func.func @transform_4(%arg0: i32) -> (i32, i32) {
    %c0_i32 = arith.constant 0 : i32
    %c0_i32_0 = arith.constant 0 : i32
    %c0_i32_1 = arith.constant 0 : i32
    return %c0_i32, %c0_i32_0 : i32, i32
  }
  func.func @transform_5(%arg0: i32) -> (i32, i32) {
    %c0_i32 = arith.constant 0 : i32
    %c0_i32_0 = arith.constant 0 : i32
    %c0_i32_1 = arith.constant 0 : i32
    return %c0_i32, %c0_i32_0 : i32, i32
  }
  func.func @transform_6(%arg0: i32) -> (i32, i32) {
    %c0_i32 = arith.constant 0 : i32
    %c0_i32_0 = arith.constant 0 : i32
    %c0_i32_1 = arith.constant 0 : i32
    return %c0_i32, %c0_i32_0 : i32, i32
  }
  func.func @transform_7(%arg0: i32) -> (i32, i32) {
    %c0_i32 = arith.constant 0 : i32
    %c0_i32_0 = arith.constant 0 : i32
    %c0_i32_1 = arith.constant 0 : i32
    return %c0_i32, %c0_i32_0 : i32, i32
  }
  func.func @transform_8(%arg0: i32) -> (i32, i32) {
    %c0_i32 = arith.constant 0 : i32
    %c0_i32_0 = arith.constant 0 : i32
    %c0_i32_1 = arith.constant 0 : i32
    return %c0_i32, %c0_i32_0 : i32, i32
  }
  func.func @transform_9(%arg0: i32) -> (i32, i32) {
    %c0_i32 = arith.constant 0 : i32
    %c0_i32_0 = arith.constant 0 : i32
    return %arg0, %c0_i32 : i32, i32
  }
}

</mosaic_0001>

<llo_original>
// kernel: tpu_custom_call.1
$region0: #{tpu_custom_call.1}
  #allocation0 [shape = 'u32[]', space=smem, size = 0x4, offset = 0x4, fixed_abs, tag = 'smem constant byte address 0x4 - core index']
  #allocation1 [shape = 'u32[144,128]{1,0:T(1,128)}', space=vmem, size = 0x12000, scoped, tag = 'internal scratch']
  %s0 = inlined_call_operand.vmem [shape: f32[2,8], index: 0, kind: input, shape index: {}]
  %s1 = inlined_call_operand.vmem [shape: f32[8,32], index: 1, kind: input, shape index: {}]
  %s2 = inlined_call_operand.vmem [shape: f32[1,32], index: 2, kind: input, shape index: {}]
  %s3 = inlined_call_operand.vmem [shape: f32[32,32], index: 3, kind: input, shape index: {}]
  %s4 = inlined_call_operand.vmem [shape: f32[1,32], index: 4, kind: input, shape index: {}]
  %s5 = inlined_call_operand.hbm [shape: f32[32,32], index: 5, kind: input, shape index: {}]
  %s6 = inlined_call_operand.vmem [shape: f32[1,32], index: 6, kind: input, shape index: {}]
  %s7 = inlined_call_operand.vmem [shape: f32[32,4], index: 7, kind: input, shape index: {}]
  %s8 = inlined_call_operand.vmem [shape: f32[1,4], index: 8, kind: input, shape index: {}]
  %s9 = inlined_call_operand.hbm [shape: f32[2,4], index: 9, kind: output, shape index: {}]
  %s10 = sld [smem:[#allocation0]]
  $region50: #{tpu_custom_call.1} parent=0
    _
  %s12 = ssub.s32 1, %s10
  %s13 = scalar_select 0, %s12, %s10
  $region1: #{tpu_custom_call.1} parent=0
    #allocation2 [shape = 'u8[16384]{0}', space=vmem, size = 0x4000, scoped, tag = 'input window, operand 5, single buffered']
    #allocation3 [shape = 's32[1]{0}', space=sflag, size = 0x4, scoped, tag = 'scoped memory for tpu_custom_call.1']
    #allocation4 [shape = 's32[1]{0}', space=sflag, size = 0x4, scoped, tag = 'scoped memory for tpu_custom_call.1']
    #allocation5 [shape = 'u8[4096]{0}', space=vmem, size = 0x1000, scoped, tag = 'output window, operand 0, single buffered']
    %14 = vsyncpa [#allocation3], 0
    %15 = vsyncpa [#allocation4], 0
    // Predicated region
    $region2: #{tpu_custom_call.1} parent=1 // pred_check
      _
    $region3: #{tpu_custom_call.1} parent=1 // pred_check_branch
      %17 = sbr.rel (0) target = $region5
    $region4: #{tpu_custom_call.1} parent=1 // pred_region
      _
    $region5: #{tpu_custom_call.1} parent=1 // pred_fallthru
      _
    // Predicated region
    $region6: #{tpu_custom_call.1} parent=1 // pred_check
      _
    $region7: #{tpu_custom_call.1} parent=1 // pred_check_branch
      %19 = sbr.rel (0) target = $region9
    $region8: #{tpu_custom_call.1} parent=1 // pred_region
      _
    $region9: #{tpu_custom_call.1} parent=1 // pred_fallthru
      _
    // Predicated region
    $region10: #{tpu_custom_call.1} parent=1 // pred_check
      _
    $region11: #{tpu_custom_call.1} parent=1 // pred_check_branch
      %21 = sbr.rel (0) target = $region13
    $region12: #{tpu_custom_call.1} parent=1 // pred_region
      _
    $region13: #{tpu_custom_call.1} parent=1 // pred_fallthru
      _
    // Predicated region
    $region14: #{tpu_custom_call.1} parent=1 // pred_check
      _
    $region15: #{tpu_custom_call.1} parent=1 // pred_check_branch
      %23 = sbr.rel (0) target = $region17
    $region16: #{tpu_custom_call.1} parent=1 // pred_region
      _
    $region17: #{tpu_custom_call.1} parent=1 // pred_fallthru
      _
    // Predicated region
    $region18: #{tpu_custom_call.1} parent=1 // pred_check
      _
    $region19: #{tpu_custom_call.1} parent=1 // pred_check_branch
      %25 = sbr.rel (0) target = $region21
    $region20: #{tpu_custom_call.1} parent=1 // pred_region
      _
    $region21: #{tpu_custom_call.1} parent=1 // pred_fallthru
      _
    // Predicated region
    $region22: #{tpu_custom_call.1} parent=1 // pred_check
      _
    $region23: #{tpu_custom_call.1} parent=1 // pred_check_branch
      %27 = sbr.rel (0) target = $region25
    $region24: #{tpu_custom_call.1} parent=1 // pred_region
      %s29 = ssub.s32 512, 512
      %30 = vsyncadd [#allocation3], %s29
      %s31 = sshll.u32 [#allocation2], 4
      %s32 = int_to_ptr.vmem [resolvable:$true] %s31
      %37 = dma.hbm_to_vmem [thread:$0]  %s5, 512, %s32, [#allocation3], 128, 128, 8
    $region25: #{tpu_custom_call.1} parent=1 // pred_fallthru
      _
    // Predicated region
    $region26: #{tpu_custom_call.1} parent=1 // pred_check
      _
    $region27: #{tpu_custom_call.1} parent=1 // pred_check_branch
      %39 = sbr.rel (0) target = $region29
    $region28: #{tpu_custom_call.1} parent=1 // pred_region
      _
    $region29: #{tpu_custom_call.1} parent=1 // pred_fallthru
      _
    // Predicated region
    $region30: #{tpu_custom_call.1} parent=1 // pred_check
      _
    $region31: #{tpu_custom_call.1} parent=1 // pred_check_branch
      %41 = sbr.rel (0) target = $region33
    $region32: #{tpu_custom_call.1} parent=1 // pred_region
      _
    $region33: #{tpu_custom_call.1} parent=1 // pred_fallthru
      _
    // Predicated region
    $region34: #{tpu_custom_call.1} parent=1 // pred_check
      _
    $region35: #{tpu_custom_call.1} parent=1 // pred_check_branch
      %43 = sbr.rel (0) target = $region37
    $region36: #{tpu_custom_call.1} parent=1 // pred_region
      _
    $region37: #{tpu_custom_call.1} parent=1 // pred_fallthru
      _
    // Predicated region
    $region38: #{tpu_custom_call.1} parent=1 // pred_check
      _
    $region39: #{tpu_custom_call.1} parent=1 // pred_check_branch
      %45 = sbr.rel (0) target = $region41
    $region40: #{tpu_custom_call.1} parent=1 // pred_region
      %46 = dma.done [#allocation3], 512
    $region41: #{tpu_custom_call.1} parent=1 // pred_fallthru
      _
    %v47 = vld [vmem:[%s0] sm:$0xff]
    %v48 = vld [vmem:[%s1] sm:$0xff]
    %v49 = vld [vmem:[%s2] sm:$0x1]
    %v51 = vlaneseq
    %v52 = vshrl.u32 %v51, 7
    %v53 = vsub.s32 0, %v52
    %v54 = vrot.slane %v49, %v53
    %vm56 = vcmask 64512
    %v58 = vsel %vm56, %v47, 0
    %60 = vmatprep.subr.mxu0 0.0
    %61 = vmatpush1.msra.mxu0 %v48
    %62 = vmatprep.subr.mxu0 0.0
    %63 = vmatpush1.msra.mxu0 0.0
    %64 = vmatprep.subr.mxu0 0.0
    %65 = vmatpush1.msra.mxu0 0.0
    %66 = vmatprep.subr.mxu0 0.0
    %67 = vmatpush1.msra.mxu0 0.0
    %68 = vmatprep.subr.mxu0 0.0
    %69 = vmatpush1.msra.mxu0 0.0
    %70 = vmatprep.subr.mxu0 0.0
    %71 = vmatpush1.msra.mxu0 0.0
    %72 = vmatprep.subr.mxu0 0.0
    %73 = vmatpush1.msra.mxu0 0.0
    %74 = vmatprep.subr.mxu0 0.0
    %75 = vmatpush1.msra.mxu0 0.0
    %76 = vmatprep.subr.mxu0 0.0
    %77 = vmatpush1.msra.mxu0 0.0
    %78 = vmatprep.subr.mxu0 0.0
    %79 = vmatpush1.msra.mxu0 0.0
    %80 = vmatprep.subr.mxu0 0.0
    %81 = vmatpush1.msra.mxu0 0.0
    %82 = vmatprep.subr.mxu0 0.0
    %83 = vmatpush1.msra.mxu0 0.0
    %84 = vmatprep.subr.mxu0 0.0
    %85 = vmatpush1.msra.mxu0 0.0
    %86 = vmatprep.subr.mxu0 0.0
    %87 = vmatpush1.msra.mxu0 0.0
    %88 = vmatprep.subr.mxu0 0.0
    %89 = vmatpush1.msra.mxu0 0.0
    %90 = vmatprep.subr.mxu0 0.0
    %91 = vmatpush1.msra.mxu0 0.0
    %92 = vmatprep.subr.mxu0 0.0
    %93 = vmatpush1.msra.mxu0 0.0
    %94 = vmatprep.subr.mxu0 0.0
    %95 = vmatpush1.msra.mxu0 0.0
    %96 = vmatprep.subr.mxu0 0.0
    %97 = vmatpush1.msra.mxu0 0.0
    %98 = vmatprep.subr.mxu0 0.0
    %99 = vmatpush1.msra.mxu0 0.0
    %100 = vmatprep.subr.mxu0 0.0
    %101 = vmatpush1.msra.mxu0 0.0
    %102 = vmatprep.subr.mxu0 0.0
    %103 = vmatpush1.msra.mxu0 0.0
    %104 = vmatprep.subr.mxu0 0.0
    %105 = vmatpush1.msra.mxu0 0.0
    %106 = vmatprep.subr.mxu0 0.0
    %107 = vmatpush1.msra.mxu0 0.0
    %108 = vmatprep.subr.mxu0 0.0
    %109 = vmatpush1.msra.mxu0 0.0
    %110 = vmatprep.subr.mxu0 0.0
    %111 = vmatpush1.msra.mxu0 0.0
    %112 = vmatprep.subr.mxu0 0.0
    %113 = vmatpush1.msra.mxu0 0.0
    %114 = vmatprep.subr.mxu0 0.0
    %115 = vmatpush1.msra.mxu0 0.0
    %116 = vmatprep.subr.mxu0 0.0
    %117 = vmatpush1.msra.mxu0 0.0
    %118 = vmatprep.subr.mxu0 0.0
    %119 = vmatpush1.msra.mxu0 0.0
    %120 = vmatprep.subr.mxu0 0.0
    %121 = vmatpush1.msra.mxu0 0.0
    %122 = vmatprep.subr.mxu0 0.0
    %123 = vmatpush1.msra.mxu0 0.0
    %124 = vmatprep.mubr.f32.mxu0 0.0
    %125 = vmatmul.mubr.f32.gmra.mrb[0].mxu0 %v58
    %v126 = vpop.f32.mrb[0].mxu0
    %v127 = vadd.f32 %v54, %v126
    %v128 = vpop.f32.mrb[0].mxu0
    %129 = vdwg.mxu0
    %v130 = vmax.f32 %v127, 0.0
    %v131 = vld [vmem:[%s3] sm:$0xff]
    %v132 = vld [vmem:[%s3 + $0x8] sm:$0xff]
    %v133 = vld [vmem:[%s3 + $0x10] sm:$0xff]
    %v134 = vld [vmem:[%s3 + $0x18] sm:$0xff]
    %v135 = vld [vmem:[%s4] sm:$0x1]
    %v137 = vlaneseq
    %v138 = vshrl.u32 %v137, 7
    %v139 = vsub.s32 0, %v138
    %v140 = vrot.slane %v135, %v139
    %vm142 = vcmask 261120
    %v144 = vsel %vm142, %v130, 0
    %146 = vmatprep.subr.mxu0 0.0
    %147 = vmatpush1.msra.mxu0 %v131
    %148 = vmatprep.subr.mxu0 0.0
    %149 = vmatpush1.msra.mxu0 %v132
    %150 = vmatprep.subr.mxu0 0.0
    %151 = vmatpush1.msra.mxu0 %v133
    %152 = vmatprep.subr.mxu0 0.0
    %153 = vmatpush1.msra.mxu0 %v134
    %154 = vmatprep.subr.mxu0 0.0
    %155 = vmatpush1.msra.mxu0 0.0
    %156 = vmatprep.subr.mxu0 0.0
    %157 = vmatpush1.msra.mxu0 0.0
    %158 = vmatprep.subr.mxu0 0.0
    %159 = vmatpush1.msra.mxu0 0.0
    %160 = vmatprep.subr.mxu0 0.0
    %161 = vmatpush1.msra.mxu0 0.0
    %162 = vmatprep.subr.mxu0 0.0
    %163 = vmatpush1.msra.mxu0 0.0
    %164 = vmatprep.subr.mxu0 0.0
    %165 = vmatpush1.msra.mxu0 0.0
    %166 = vmatprep.subr.mxu0 0.0
    %167 = vmatpush1.msra.mxu0 0.0
    %168 = vmatprep.subr.mxu0 0.0
    %169 = vmatpush1.msra.mxu0 0.0
    %170 = vmatprep.subr.mxu0 0.0
    %171 = vmatpush1.msra.mxu0 0.0
    %172 = vmatprep.subr.mxu0 0.0
    %173 = vmatpush1.msra.mxu0 0.0
    %174 = vmatprep.subr.mxu0 0.0
    %175 = vmatpush1.msra.mxu0 0.0
    %176 = vmatprep.subr.mxu0 0.0
    %177 = vmatpush1.msra.mxu0 0.0
    %178 = vmatprep.subr.mxu0 0.0
    %179 = vmatpush1.msra.mxu0 0.0
    %180 = vmatprep.subr.mxu0 0.0
    %181 = vmatpush1.msra.mxu0 0.0
    %182 = vmatprep.subr.mxu0 0.0
    %183 = vmatpush1.msra.mxu0 0.0
    %184 = vmatprep.subr.mxu0 0.0
    %185 = vmatpush1.msra.mxu0 0.0
    %186 = vmatprep.subr.mxu0 0.0
    %187 = vmatpush1.msra.mxu0 0.0
    %188 = vmatprep.subr.mxu0 0.0
    %189 = vmatpush1.msra.mxu0 0.0
    %190 = vmatprep.subr.mxu0 0.0
    %191 = vmatpush1.msra.mxu0 0.0
    %192 = vmatprep.subr.mxu0 0.0
    %193 = vmatpush1.msra.mxu0 0.0
    %194 = vmatprep.subr.mxu0 0.0
    %195 = vmatpush1.msra.mxu0 0.0
    %196 = vmatprep.subr.mxu0 0.0
    %197 = vmatpush1.msra.mxu0 0.0
    %198 = vmatprep.subr.mxu0 0.0
    %199 = vmatpush1.msra.mxu0 0.0
    %200 = vmatprep.subr.mxu0 0.0
    %201 = vmatpush1.msra.mxu0 0.0
    %202 = vmatprep.subr.mxu0 0.0
    %203 = vmatpush1.msra.mxu0 0.0
    %204 = vmatprep.subr.mxu0 0.0
    %205 = vmatpush1.msra.mxu0 0.0
    %206 = vmatprep.subr.mxu0 0.0
    %207 = vmatpush1.msra.mxu0 0.0
    %208 = vmatprep.subr.mxu0 0.0
    %209 = vmatpush1.msra.mxu0 0.0
    %210 = vmatprep.mubr.f32.mxu0 0.0
    %211 = vmatmul.mubr.f32.gmra.mrb[0].mxu0 %v144
    %v212 = vpop.f32.mrb[0].mxu0
    %v213 = vadd.f32 %v140, %v212
    %v214 = vpop.f32.mrb[0].mxu0
    %215 = vdwg.mxu0
    %v216 = vmax.f32 %v213, 0.0
    %v217 = vld [vmem:[#allocation2] sm:$0xff]
    %v218 = vld [vmem:[#allocation2 + $0x8] sm:$0xff]
    %v219 = vld [vmem:[#allocation2 + $0x10] sm:$0xff]
    %v220 = vld [vmem:[#allocation2 + $0x18] sm:$0xff]
    %v221 = vld [vmem:[%s6] sm:$0x1]
    %v223 = vlaneseq
    %v224 = vshrl.u32 %v223, 7
    %v225 = vsub.s32 0, %v224
    %v226 = vrot.slane %v221, %v225
    %v229 = vsel %vm142, %v216, 0
    %231 = vmatprep.subr.mxu0 0.0
    %232 = vmatpush1.msra.mxu0 %v217
    %233 = vmatprep.subr.mxu0 0.0
    %234 = vmatpush1.msra.mxu0 %v218
    %235 = vmatprep.subr.mxu0 0.0
    %236 = vmatpush1.msra.mxu0 %v219
    %237 = vmatprep.subr.mxu0 0.0
    %238 = vmatpush1.msra.mxu0 %v220
    %239 = vmatprep.subr.mxu0 0.0
    %240 = vmatpush1.msra.mxu0 0.0
    %241 = vmatprep.subr.mxu0 0.0
    %242 = vmatpush1.msra.mxu0 0.0
    %243 = vmatprep.subr.mxu0 0.0
    %244 = vmatpush1.msra.mxu0 0.0
    %245 = vmatprep.subr.mxu0 0.0
    %246 = vmatpush1.msra.mxu0 0.0
    %247 = vmatprep.subr.mxu0 0.0
    %248 = vmatpush1.msra.mxu0 0.0
    %249 = vmatprep.subr.mxu0 0.0
    %250 = vmatpush1.msra.mxu0 0.0
    %251 = vmatprep.subr.mxu0 0.0
    %252 = vmatpush1.msra.mxu0 0.0
    %253 = vmatprep.subr.mxu0 0.0
    %254 = vmatpush1.msra.mxu0 0.0
    %255 = vmatprep.subr.mxu0 0.0
    %256 = vmatpush1.msra.mxu0 0.0
    %257 = vmatprep.subr.mxu0 0.0
    %258 = vmatpush1.msra.mxu0 0.0
    %259 = vmatprep.subr.mxu0 0.0
    %260 = vmatpush1.msra.mxu0 0.0
    %261 = vmatprep.subr.mxu0 0.0
    %262 = vmatpush1.msra.mxu0 0.0
    %263 = vmatprep.subr.mxu0 0.0
    %264 = vmatpush1.msra.mxu0 0.0
    %265 = vmatprep.subr.mxu0 0.0
    %266 = vmatpush1.msra.mxu0 0.0
    %267 = vmatprep.subr.mxu0 0.0
    %268 = vmatpush1.msra.mxu0 0.0
    %269 = vmatprep.subr.mxu0 0.0
    %270 = vmatpush1.msra.mxu0 0.0
    %271 = vmatprep.subr.mxu0 0.0
    %272 = vmatpush1.msra.mxu0 0.0
    %273 = vmatprep.subr.mxu0 0.0
    %274 = vmatpush1.msra.mxu0 0.0
    %275 = vmatprep.subr.mxu0 0.0
    %276 = vmatpush1.msra.mxu0 0.0
    %277 = vmatprep.subr.mxu0 0.0
    %278 = vmatpush1.msra.mxu0 0.0
    %279 = vmatprep.subr.mxu0 0.0
    %280 = vmatpush1.msra.mxu0 0.0
    %281 = vmatprep.subr.mxu0 0.0
    %282 = vmatpush1.msra.mxu0 0.0
    %283 = vmatprep.subr.mxu0 0.0
    %284 = vmatpush1.msra.mxu0 0.0
    %285 = vmatprep.subr.mxu0 0.0
    %286 = vmatpush1.msra.mxu0 0.0
    %287 = vmatprep.subr.mxu0 0.0
    %288 = vmatpush1.msra.mxu0 0.0
    %289 = vmatprep.subr.mxu0 0.0
    %290 = vmatpush1.msra.mxu0 0.0
    %291 = vmatprep.subr.mxu0 0.0
    %292 = vmatpush1.msra.mxu0 0.0
    %293 = vmatprep.subr.mxu0 0.0
    %294 = vmatpush1.msra.mxu0 0.0
    %295 = vmatprep.mubr.f32.mxu0 0.0
    %296 = vmatmul.mubr.f32.gmra.mrb[0].mxu0 %v229
    %v297 = vpop.f32.mrb[0].mxu0
    %v298 = vadd.f32 %v226, %v297
    %v299 = vpop.f32.mrb[0].mxu0
    %300 = vdwg.mxu0
    %v301 = vmax.f32 %v298, 0.0
    %v302 = vld [vmem:[%s7] sm:$0xff]
    %v303 = vld [vmem:[%s7 + $0x8] sm:$0xff]
    %v304 = vld [vmem:[%s7 + $0x10] sm:$0xff]
    %v305 = vld [vmem:[%s7 + $0x18] sm:$0xff]
    %v306 = vld [vmem:[%s8] sm:$0x1]
    %v308 = vlaneseq
    %v309 = vshrl.u32 %v308, 7
    %v310 = vsub.s32 0, %v309
    %v311 = vrot.slane %v306, %v310
    %v314 = vsel %vm142, %v301, 0
    %316 = vmatprep.subr.mxu0 0.0
    %317 = vmatpush1.msra.mxu0 %v302
    %318 = vmatprep.subr.mxu0 0.0
    %319 = vmatpush1.msra.mxu0 %v303
    %320 = vmatprep.subr.mxu0 0.0
    %321 = vmatpush1.msra.mxu0 %v304
    %322 = vmatprep.subr.mxu0 0.0
    %323 = vmatpush1.msra.mxu0 %v305
    %324 = vmatprep.subr.mxu0 0.0
    %325 = vmatpush1.msra.mxu0 0.0
    %326 = vmatprep.subr.mxu0 0.0
    %327 = vmatpush1.msra.mxu0 0.0
    %328 = vmatprep.subr.mxu0 0.0
    %329 = vmatpush1.msra.mxu0 0.0
    %330 = vmatprep.subr.mxu0 0.0
    %331 = vmatpush1.msra.mxu0 0.0
    %332 = vmatprep.subr.mxu0 0.0
    %333 = vmatpush1.msra.mxu0 0.0
    %334 = vmatprep.subr.mxu0 0.0
    %335 = vmatpush1.msra.mxu0 0.0
    %336 = vmatprep.subr.mxu0 0.0
    %337 = vmatpush1.msra.mxu0 0.0
    %338 = vmatprep.subr.mxu0 0.0
    %339 = vmatpush1.msra.mxu0 0.0
    %340 = vmatprep.subr.mxu0 0.0
    %341 = vmatpush1.msra.mxu0 0.0
    %342 = vmatprep.subr.mxu0 0.0
    %343 = vmatpush1.msra.mxu0 0.0
    %344 = vmatprep.subr.mxu0 0.0
    %345 = vmatpush1.msra.mxu0 0.0
    %346 = vmatprep.subr.mxu0 0.0
    %347 = vmatpush1.msra.mxu0 0.0
    %348 = vmatprep.subr.mxu0 0.0
    %349 = vmatpush1.msra.mxu0 0.0
    %350 = vmatprep.subr.mxu0 0.0
    %351 = vmatpush1.msra.mxu0 0.0
    %352 = vmatprep.subr.mxu0 0.0
    %353 = vmatpush1.msra.mxu0 0.0
    %354 = vmatprep.subr.mxu0 0.0
    %355 = vmatpush1.msra.mxu0 0.0
    %356 = vmatprep.subr.mxu0 0.0
    %357 = vmatpush1.msra.mxu0 0.0
    %358 = vmatprep.subr.mxu0 0.0
    %359 = vmatpush1.msra.mxu0 0.0
    %360 = vmatprep.subr.mxu0 0.0
    %361 = vmatpush1.msra.mxu0 0.0
    %362 = vmatprep.subr.mxu0 0.0
    %363 = vmatpush1.msra.mxu0 0.0
    %364 = vmatprep.subr.mxu0 0.0
    %365 = vmatpush1.msra.mxu0 0.0
    %366 = vmatprep.subr.mxu0 0.0
    %367 = vmatpush1.msra.mxu0 0.0
    %368 = vmatprep.subr.mxu0 0.0
    %369 = vmatpush1.msra.mxu0 0.0
    %370 = vmatprep.subr.mxu0 0.0
    %371 = vmatpush1.msra.mxu0 0.0
    %372 = vmatprep.subr.mxu0 0.0
    %373 = vmatpush1.msra.mxu0 0.0
    %374 = vmatprep.subr.mxu0 0.0
    %375 = vmatpush1.msra.mxu0 0.0
    %376 = vmatprep.subr.mxu0 0.0
    %377 = vmatpush1.msra.mxu0 0.0
    %378 = vmatprep.subr.mxu0 0.0
    %379 = vmatpush1.msra.mxu0 0.0
    %380 = vmatprep.mubr.f32.mxu0 0.0
    %381 = vmatmul.mubr.f32.gmra.mrb[0].mxu0 %v314
    %v382 = vpop.f32.mrb[0].mxu0
    %v383 = vadd.f32 %v311, %v382
    %v384 = vpop.f32.mrb[0].mxu0
    %385 = vdwg.mxu0
    %vm386 = vcmask 31744
    %387 = vst.msk [vmem:[#allocation5] sm:$0xff] %vm386, %v383
    // Predicated region
    $region42: #{tpu_custom_call.1} parent=1 // pred_check
      _
    $region43: #{tpu_custom_call.1} parent=1 // pred_check_branch
      %389 = sbr.rel (0) target = $region45
    $region44: #{tpu_custom_call.1} parent=1 // pred_region
      %s391 = ssub.s32 128, 32
      %392 = vsyncadd [#allocation4], %s391
      %s393 = sshll.u32 [#allocation5], 4
      %s394 = int_to_ptr.vmem [resolvable:$true] %s393
      %399 = dma.vmem_to_hbm [thread:$0]  %s394, 32, %s9, [#allocation4], 32, 32, 2
    $region45: #{tpu_custom_call.1} parent=1 // pred_fallthru
      _
    // Predicated region
    $region46: #{tpu_custom_call.1} parent=1 // pred_check
      _
    $region47: #{tpu_custom_call.1} parent=1 // pred_check_branch
      %401 = sbr.rel (0) target = $region49
    $region48: #{tpu_custom_call.1} parent=1 // pred_region
      %402 = dma.done [#allocation4], 128
    $region49: #{tpu_custom_call.1} parent=1 // pred_fallthru
      _
    %403 = vsyncpa [#allocation3], 1
    %404 = vsyncpa [#allocation4], 1

</llo_original>
